<compile_context>
chip_gen: v5e
topology: v5e:2x2
jax: 0.10.0
libtpu: 0.0.40
codegen_flags: <defaults>
</compile_context>

<pallas_src>
import jax
import jax.numpy as jnp
from jax.experimental import pallas as pl
from jax.experimental.pallas import tpu as pltpu  # noqa: F401  (TPU backend)

Q_ROWS, K_ROWS, D_QK, D_V = 42, 17, 84, 42
DROPOUT_P = 0.3
SCALE = float(D_QK) ** (-0.2)
# keep element iff uniform-uint32 bits >= p * 2^32   ->   P(keep) = 1 - p
_DROP_THRESHOLD = int(DROPOUT_P * (1 << 32))  # 1288490188

# pl.reciprocal(approx=True) maps to the TPU EUP unit; off-TPU (interpret/CPU
# test runs) fall back to a plain divide so the kernel lowers everywhere.
_ON_TPU = jax.default_backend() == "tpu"


def _sdpa_kernel(q_ref, kt_ref, v_ref, rbits_ref, o_ref):
    q = q_ref[...]                       # (42, 84) f32
    kt = kt_ref[...]                     # (84, 17) f32 (key pre-transposed)

    # qk = query @ key^T  -> plain MXU matmul, no implicit transpose of K.
    qk = jnp.dot(q, kt, preferred_element_type=jnp.float32)       # (42, 17)

    scaled = qk * SCALE

    # Numerically stable row softmax; keep the row normalization un-applied
    # so it can be fused with the dropout 1/(1-p) scale below.
    m = jnp.max(scaled, axis=-1, keepdims=True)                   # (42, 1)
    e = jnp.exp(scaled - m)                                       # (42, 17)
    denom = jnp.sum(e, axis=-1, keepdims=True)                    # (42, 1)

    # 1 / (denom * (1 - p)): softmax normalization and inverted-dropout scale
    # folded into one reciprocal -> a single broadcast multiply on the path.
    scaled_denom = denom * (1.0 - DROPOUT_P)
    if _ON_TPU:
        inv = pl.reciprocal(scaled_denom, approx=True)            # EUP slot
    else:
        inv = 1.0 / scaled_denom

    # Integer-domain dropout threshold: one vcmp + one vsel per vreg.
    keep = rbits_ref[...] >= jnp.uint32(_DROP_THRESHOLD)          # (42, 17)
    dropped = jnp.where(keep, e * inv, 0.0)                       # (42, 17)

    # output = dropout_qk @ value
    o_ref[...] = jnp.dot(dropped, v_ref[...],
                         preferred_element_type=jnp.float32)      # (42, 42)


@jax.jit
def model_forward(x1, query, key, value, rng_key):
    # x1 is unused by the reference module's forward; kept for API fidelity.
    del x1
    # Layout plumbing only (no compute hoisting): present K transposed.
    key_t = key.T                                                 # (84, 17)
    # Fresh dropout mask per call iff the caller supplies a fresh rng_key.
    # TODO(synk): bit-exact reproduction of torch's dropout RNG stream is not
    # possible; the mask distribution (keep prob 0.7, scale 1/0.7) matches.
    rbits = jax.random.bits(rng_key, (Q_ROWS, K_ROWS), dtype=jnp.uint32)
    return pl.pallas_call(
        _sdpa_kernel,
        out_shape=jax.ShapeDtypeStruct((Q_ROWS, D_V), jnp.float32),
        in_specs=[
            pl.BlockSpec((Q_ROWS, D_QK), lambda: (0, 0)),    # query     (42, 84)
            pl.BlockSpec((D_QK, K_ROWS), lambda: (0, 0)),    # key^T     (84, 17)
            pl.BlockSpec((K_ROWS, D_V), lambda: (0, 0)),     # value     (17, 42)
            pl.BlockSpec((Q_ROWS, K_ROWS), lambda: (0, 0)),  # rand bits (42, 17)
        ],
        out_specs=pl.BlockSpec((Q_ROWS, D_V), lambda: (0, 0)),
    )(query, key_t, value, rbits)


if __name__ == "__main__":
    root = jax.random.PRNGKey(0)
    kq, kk, kv, kx, kd = jax.random.split(root, 5)

    # Deterministic "parameters" matching the PyTorch module's shapes.
    query = jax.random.normal(kq, (Q_ROWS, D_QK), dtype=jnp.float32)   # (42, 84)
    key   = jax.random.normal(kk, (K_ROWS, D_QK), dtype=jnp.float32)   # (17, 84)
    value = jax.random.normal(kv, (K_ROWS, D_V), dtype=jnp.float32)    # (17, 42)

    # Example (unused) forward input.
    x1 = jax.random.normal(kx, (2, 4, 16, 16), dtype=jnp.float32)

    out = model_forward(x1, query, key, value, kd)
    out = jax.block_until_ready(out)

    assert out.shape == (Q_ROWS, D_V) and out.dtype == jnp.float32
    assert bool(jnp.all(jnp.isfinite(out)))
    print("KERNEL_OK")
</pallas_src>

<mosaic_0001>
module attributes {stable_mosaic.version = 11 : i64} {
  func.func @_sdpa_kernel(%arg0: memref<42x84xf32, #tpu.memory_space<vmem>>, %arg1: memref<84x17xf32, #tpu.memory_space<vmem>>, %arg2: memref<17x42xf32, #tpu.memory_space<vmem>>, %arg3: memref<42x17xi32, #tpu.memory_space<vmem>>, %arg4: memref<42x42xf32, #tpu.memory_space<vmem>>) attributes {dimension_semantics = [], scalar_prefetch = 0 : i64, scratch_operands = 0 : i64, tpu.core_type = #tpu.core_type<tc>} {
    %c0 = arith.constant 0 : index
    %c0_0 = arith.constant 0 : index
    %0 = vector.load %arg0[%c0, %c0_0] : memref<42x84xf32, #tpu.memory_space<vmem>>, vector<42x84xf32>
    %c0_1 = arith.constant 0 : index
    %c0_2 = arith.constant 0 : index
    %1 = vector.load %arg1[%c0_1, %c0_2] : memref<84x17xf32, #tpu.memory_space<vmem>>, vector<84x17xf32>
    %cst = arith.constant dense<0.000000e+00> : vector<42x17xf32>
    %2 = tpu.matmul %0, %1, %cst {dimension_numbers = #tpu.dot_dimension_numbers<[1], [0], [0], [1], [0, 0, 1, 1], [], []>} : vector<42x84xf32>, vector<84x17xf32>, vector<42x17xf32> -> vector<42x17xf32>
    %cst_3 = arith.constant 0.412234306 : f32
    %3 = vector.broadcast %cst_3 : f32 to vector<42x17xf32>
    %4 = arith.mulf %2, %3 : vector<42x17xf32>
    %cst_4 = arith.constant dense<0xFF800000> : vector<42xf32>
    %5 = vector.multi_reduction <maximumf>, %4, %cst_4 [1] : vector<42x17xf32> to vector<42xf32>
    %6 = vector.shape_cast %5 : vector<42xf32> to vector<42x1xf32>
    %7 = vector.broadcast %6 : vector<42x1xf32> to vector<42x17xf32>
    %8 = arith.subf %4, %7 : vector<42x17xf32>
    %9 = math.exp %8 : vector<42x17xf32>
    %cst_5 = arith.constant dense<0.000000e+00> : vector<42xf32>
    %10 = vector.multi_reduction <add>, %9, %cst_5 [1] : vector<42x17xf32> to vector<42xf32>
    %11 = vector.shape_cast %10 : vector<42xf32> to vector<42x1xf32>
    %cst_6 = arith.constant 0.699999988 : f32
    %12 = vector.broadcast %cst_6 : f32 to vector<42x1xf32>
    %13 = arith.mulf %11, %12 : vector<42x1xf32>
    %cst_7 = arith.constant 1.000000e+00 : f32
    %14 = vector.broadcast %cst_7 : f32 to vector<42x1xf32>
    %15 = arith.divf %14, %13 : vector<42x1xf32>
    %c0_8 = arith.constant 0 : index
    %c0_9 = arith.constant 0 : index
    %16 = vector.load %arg3[%c0_8, %c0_9] : memref<42x17xi32, #tpu.memory_space<vmem>>, vector<42x17xi32>
    %c1288490188_i32 = arith.constant 1288490188 : i32
    %17 = vector.broadcast %c1288490188_i32 : i32 to vector<42x17xi32>
    %18 = arith.cmpi uge, %16, %17 : vector<42x17xi32>
    %19 = vector.broadcast %15 : vector<42x1xf32> to vector<42x17xf32>
    %20 = arith.mulf %9, %19 : vector<42x17xf32>
    %cst_10 = arith.constant 0.000000e+00 : f32
    %21 = vector.broadcast %cst_10 : f32 to vector<42x17xf32>
    %22 = arith.select %18, %20, %21 : vector<42x17xi1>, vector<42x17xf32>
    %c0_11 = arith.constant 0 : index
    %c0_12 = arith.constant 0 : index
    %23 = vector.load %arg2[%c0_11, %c0_12] : memref<17x42xf32, #tpu.memory_space<vmem>>, vector<17x42xf32>
    %cst_13 = arith.constant dense<0.000000e+00> : vector<42x42xf32>
    %24 = tpu.matmul %22, %23, %cst_13 {dimension_numbers = #tpu.dot_dimension_numbers<[1], [0], [0], [1], [0, 0, 1, 1], [], []>} : vector<42x17xf32>, vector<17x42xf32>, vector<42x42xf32> -> vector<42x42xf32>
    %c0_14 = arith.constant 0 : index
    %c0_15 = arith.constant 0 : index
    %25 = vector.load %arg4[%c0_14, %c0_15] : memref<42x42xf32, #tpu.memory_space<vmem>>, vector<42x42xf32>
    tpu.vector_store %arg4[%c0_14, %c0_15], %24 {strides = array<i32>} : memref<42x42xf32, #tpu.memory_space<vmem>>, vector<42x42xf32>,
    return
  }
}

</mosaic_0001>

<llo_original>
// kernel: model_forward.1
$region0: #{model_forward.1}
  #allocation0 [shape = 'u32[]', space=smem, size = 0x4, offset = 0x4, fixed_abs, tag = 'smem constant byte address 0x4 - core index']
  #allocation1 [shape = 'u32[72,128]{1,0:T(1,128)}', space=vmem, size = 0x9000, scoped, tag = 'internal scratch']
  %s0 = inlined_call_operand.vmem [shape: f32[42,84], index: 0, kind: input, shape index: {}]
  %s1 = inlined_call_operand.vmem [shape: f32[84,17], index: 1, kind: input, shape index: {}]
  %s2 = inlined_call_operand.vmem [shape: f32[17,42], index: 2, kind: input, shape index: {}]
  %s3 = inlined_call_operand.vmem [shape: u32[42,17], index: 3, kind: input, shape index: {}]
  %s4 = inlined_call_operand.hbm [shape: f32[42,42], index: 4, kind: output, shape index: {}]
  %s5 = sld [smem:[#allocation0]]
  $region26: #{model_forward.1} parent=0
    _
  %s7 = ssub.s32 1, %s5
  %s8 = scalar_select 0, %s7, %s5
  $region1: #{model_forward.1} parent=0
    #allocation2 [shape = 'u8[24576]{0}', space=vmem, size = 0x6000, scoped, tag = 'output window, operand 0, single buffered']
    #allocation3 [shape = 's32[1]{0}', space=sflag, size = 0x4, scoped, tag = 'scoped memory for model_forward.1']
    %9 = vsyncpa [#allocation3], 0
    // Predicated region
    $region2: #{model_forward.1} parent=1 // pred_check
      _
    $region3: #{model_forward.1} parent=1 // pred_check_branch
      %11 = sbr.rel (0) target = $region5
    $region4: #{model_forward.1} parent=1 // pred_region
      _
    $region5: #{model_forward.1} parent=1 // pred_fallthru
      _
    // Predicated region
    $region6: #{model_forward.1} parent=1 // pred_check
      _
    $region7: #{model_forward.1} parent=1 // pred_check_branch
      %13 = sbr.rel (0) target = $region9
    $region8: #{model_forward.1} parent=1 // pred_region
      _
    $region9: #{model_forward.1} parent=1 // pred_fallthru
      _
    // Predicated region
    $region10: #{model_forward.1} parent=1 // pred_check
      _
    $region11: #{model_forward.1} parent=1 // pred_check_branch
      %15 = sbr.rel (0) target = $region13
    $region12: #{model_forward.1} parent=1 // pred_region
      _
    $region13: #{model_forward.1} parent=1 // pred_fallthru
      _
    // Predicated region
    $region14: #{model_forward.1} parent=1 // pred_check
      _
    $region15: #{model_forward.1} parent=1 // pred_check_branch
      %17 = sbr.rel (0) target = $region17
    $region16: #{model_forward.1} parent=1 // pred_region
      _
    $region17: #{model_forward.1} parent=1 // pred_fallthru
      _
    %v18 = vld [vmem:[%s0] sm:$0xff]
    %v19 = vld [vmem:[%s0 + $0x8] sm:$0xff]
    %v20 = vld [vmem:[%s0 + $0x10] sm:$0xff]
    %v21 = vld [vmem:[%s0 + $0x18] sm:$0xff]
    %v22 = vld [vmem:[%s0 + $0x20] sm:$0xff]
    %v23 = vld [vmem:[%s0 + $0x28] sm:$0x3]
    %v24 = vld [vmem:[%s1] sm:$0xff]
    %v25 = vld [vmem:[%s1 + $0x8] sm:$0xff]
    %v26 = vld [vmem:[%s1 + $0x10] sm:$0xff]
    %v27 = vld [vmem:[%s1 + $0x18] sm:$0xff]
    %v28 = vld [vmem:[%s1 + $0x20] sm:$0xff]
    %v29 = vld [vmem:[%s1 + $0x28] sm:$0xff]
    %v30 = vld [vmem:[%s1 + $0x30] sm:$0xff]
    %v31 = vld [vmem:[%s1 + $0x38] sm:$0xff]
    %v32 = vld [vmem:[%s1 + $0x40] sm:$0xff]
    %v33 = vld [vmem:[%s1 + $0x48] sm:$0xff]
    %v34 = vld [vmem:[%s1 + $0x50] sm:$0xf]
    %vm35 = vcmask 687104
    %v37 = vsel %vm35, %v18, 0
    %v40 = vsel %vm35, %v19, 0
    %v43 = vsel %vm35, %v20, 0
    %v46 = vsel %vm35, %v21, 0
    %v49 = vsel %vm35, %v22, 0
    %v52 = vsel %vm35, %v23, 0
    %vm54 = vcmask 1043456
    %v56 = vsel %vm54, %v34, 0
    %58 = vmatpush.msra.mxu0 0.0
    %59 = vmatpush.msra.mxu0 0.0
    %60 = vmatpush.msra.mxu0 0.0
    %61 = vmatpush.msra.mxu0 0.0
    %62 = vmatpush.msra.mxu0 0.0
    %63 = vmatpush.msra.mxu0 %v56
    %64 = vmatpush.msra.mxu0 %v33
    %65 = vmatpush.msra.mxu0 %v32
    %66 = vmatpush.msra.mxu0 %v31
    %67 = vmatpush.msra.mxu0 %v30
    %68 = vmatpush.msra.mxu0 %v29
    %69 = vmatpush.msra.mxu0 %v28
    %70 = vmatpush.msra.mxu0 %v27
    %71 = vmatpush.msra.mxu0 %v26
    %72 = vmatpush.msra.mxu0 %v25
    %73 = vmatpush.msra.mxu0 %v24
    %74 = vmatmul.f32.gmra.mxu0 %v37
    %v75 = vpop.f32.mrf.mxu0
    %v76 = vadd.f32 0.0, %v75
    %77 = vmatmul.f32.gmra.mxu0 %v40
    %v78 = vpop.f32.mrf.mxu0
    %v79 = vadd.f32 0.0, %v78
    %80 = vmatmul.f32.gmra.mxu0 %v43
    %v81 = vpop.f32.mrf.mxu0
    %v82 = vadd.f32 0.0, %v81
    %83 = vmatmul.f32.gmra.mxu0 %v46
    %v84 = vpop.f32.mrf.mxu0
    %v85 = vadd.f32 0.0, %v84
    %86 = vmatmul.f32.gmra.mxu0 %v49
    %v87 = vpop.f32.mrf.mxu0
    %v88 = vadd.f32 0.0, %v87
    %89 = vmatmul.f32.gmra.mxu0 %v52
    %v90 = vpop.f32.mrf.mxu0
    %v91 = vadd.f32 0.0, %v90
    %92 = vdwg.mxu0
    %v93 = vmul.f32 %v76, 0.4122343
    %v94 = vmul.f32 %v79, 0.4122343
    %v95 = vmul.f32 %v82, 0.4122343
    %v96 = vmul.f32 %v85, 0.4122343
    %v97 = vmul.f32 %v88, 0.4122343
    %v98 = vmul.f32 %v91, 0.4122343
    %vm99 = vcmask 138240
    %v100 = vsel %vm99, %v93, -inf
    %101 = vmax.xlane.f32.xlu0 %v100
    %v102 = vpop.xlane.xlu0 %101
    %v103 = vsel %vm99, %v94, -inf
    %104 = vmax.xlane.f32.xlu0 %v103
    %v105 = vpop.xlane.xlu0 %104
    %v106 = vsel %vm99, %v95, -inf
    %107 = vmax.xlane.f32.xlu0 %v106
    %v108 = vpop.xlane.xlu0 %107
    %v109 = vsel %vm99, %v96, -inf
    %110 = vmax.xlane.f32.xlu0 %v109
    %v111 = vpop.xlane.xlu0 %110
    %v112 = vsel %vm99, %v97, -inf
    %113 = vmax.xlane.f32.xlu0 %v112
    %v114 = vpop.xlane.xlu0 %113
    %vm115 = vcmask 132096
    %v116 = vsel %vm115, %v98, -inf
    %117 = vmax.xlane.f32.xlu0 %v116
    %v118 = vpop.xlane.xlu0 %117
    %v119 = vsub.f32 %v93, %v102
    %v120 = vsub.f32 %v94, %v105
    %v121 = vsub.f32 %v95, %v108
    %v122 = vsub.f32 %v96, %v111
    %v123 = vsub.f32 %v97, %v114
    %v124 = vsub.f32 %v98, %v118
    %v125 = vmul.f32 %v119, 1.442695
    %v126 = vpow.pop %v125
    %v127 = vmul.f32 %v120, 1.442695
    %v128 = vpow.pop %v127
    %v129 = vmul.f32 %v121, 1.442695
    %v130 = vpow.pop %v129
    %v131 = vmul.f32 %v122, 1.442695
    %v132 = vpow.pop %v131
    %v133 = vmul.f32 %v123, 1.442695
    %v134 = vpow.pop %v133
    %v135 = vmul.f32 %v124, 1.442695
    %v136 = vpow.pop %v135
    %v137 = vsel %vm99, %v126, 0.0
    %138 = vadd.xlane.f32.xlu0 %v137
    %v139 = vpop.xlane.xlu0 %138
    %v140 = vsel %vm99, %v128, 0.0
    %141 = vadd.xlane.f32.xlu0 %v140
    %v142 = vpop.xlane.xlu0 %141
    %v143 = vsel %vm99, %v130, 0.0
    %144 = vadd.xlane.f32.xlu0 %v143
    %v145 = vpop.xlane.xlu0 %144
    %v146 = vsel %vm99, %v132, 0.0
    %147 = vadd.xlane.f32.xlu0 %v146
    %v148 = vpop.xlane.xlu0 %147
    %v149 = vsel %vm99, %v134, 0.0
    %150 = vadd.xlane.f32.xlu0 %v149
    %v151 = vpop.xlane.xlu0 %150
    %v152 = vsel %vm115, %v136, 0.0
    %153 = vadd.xlane.f32.xlu0 %v152
    %v154 = vpop.xlane.xlu0 %153
    %v155 = vmul.f32 %v139, 0.7
    %v156 = vmul.f32 %v142, 0.7
    %v157 = vmul.f32 %v145, 0.7
    %v158 = vmul.f32 %v148, 0.7
    %v159 = vmul.f32 %v151, 0.7
    %v160 = vmul.f32 %v154, 0.7
    %v161 = vrcp.pop %v155
    %v162 = vmul.f32 %v155, %v161
    %v163 = vsub.f32 1.0, %v162
    %v164 = vmul.f32 %v161, %v163
    %v165 = vadd.f32 %v161, %v164
    %vm166 = vweird.f32 %v155
    %vm167 = vweird.f32 %v161
    %vm168 = vmor %vm166, %vm167
    %v169 = vsel %vm168, %v161, %v165
    %v170 = vand.u32 2147483647, %v155
    %vm171 = vcmp.eq.f32.partialorder %v170, 8.507059e+37
    %v172 = vand.u32 %v155, 2147483648
    %v173 = vor.u32 1.1754944e-38, %v172
    %v174 = vsel %vm171, %v173, %v169
    %v175 = vmul.f32 1.0, %v174
    %v176 = vrcp.pop %v156
    %v177 = vmul.f32 %v156, %v176
    %v178 = vsub.f32 1.0, %v177
    %v179 = vmul.f32 %v176, %v178
    %v180 = vadd.f32 %v176, %v179
    %vm181 = vweird.f32 %v156
    %vm182 = vweird.f32 %v176
    %vm183 = vmor %vm181, %vm182
    %v184 = vsel %vm183, %v176, %v180
    %v185 = vand.u32 2147483647, %v156
    %vm186 = vcmp.eq.f32.partialorder %v185, 8.507059e+37
    %v187 = vand.u32 %v156, 2147483648
    %v188 = vor.u32 1.1754944e-38, %v187
    %v189 = vsel %vm186, %v188, %v184
    %v190 = vmul.f32 1.0, %v189
    %v191 = vrcp.pop %v157
    %v192 = vmul.f32 %v157, %v191
    %v193 = vsub.f32 1.0, %v192
    %v194 = vmul.f32 %v191, %v193
    %v195 = vadd.f32 %v191, %v194
    %vm196 = vweird.f32 %v157
    %vm197 = vweird.f32 %v191
    %vm198 = vmor %vm196, %vm197
    %v199 = vsel %vm198, %v191, %v195
    %v200 = vand.u32 2147483647, %v157
    %vm201 = vcmp.eq.f32.partialorder %v200, 8.507059e+37
    %v202 = vand.u32 %v157, 2147483648
    %v203 = vor.u32 1.1754944e-38, %v202
    %v204 = vsel %vm201, %v203, %v199
    %v205 = vmul.f32 1.0, %v204
    %v206 = vrcp.pop %v158
    %v207 = vmul.f32 %v158, %v206
    %v208 = vsub.f32 1.0, %v207
    %v209 = vmul.f32 %v206, %v208
    %v210 = vadd.f32 %v206, %v209
    %vm211 = vweird.f32 %v158
    %vm212 = vweird.f32 %v206
    %vm213 = vmor %vm211, %vm212
    %v214 = vsel %vm213, %v206, %v210
    %v215 = vand.u32 2147483647, %v158
    %vm216 = vcmp.eq.f32.partialorder %v215, 8.507059e+37
    %v217 = vand.u32 %v158, 2147483648
    %v218 = vor.u32 1.1754944e-38, %v217
    %v219 = vsel %vm216, %v218, %v214
    %v220 = vmul.f32 1.0, %v219
    %v221 = vrcp.pop %v159
    %v222 = vmul.f32 %v159, %v221
    %v223 = vsub.f32 1.0, %v222
    %v224 = vmul.f32 %v221, %v223
    %v225 = vadd.f32 %v221, %v224
    %vm226 = vweird.f32 %v159
    %vm227 = vweird.f32 %v221
    %vm228 = vmor %vm226, %vm227
    %v229 = vsel %vm228, %v221, %v225
    %v230 = vand.u32 2147483647, %v159
    %vm231 = vcmp.eq.f32.partialorder %v230, 8.507059e+37
    %v232 = vand.u32 %v159, 2147483648
    %v233 = vor.u32 1.1754944e-38, %v232
    %v234 = vsel %vm231, %v233, %v229
    %v235 = vmul.f32 1.0, %v234
    %v236 = vrcp.pop %v160
    %v237 = vmul.f32 %v160, %v236
    %v238 = vsub.f32 1.0, %v237
    %v239 = vmul.f32 %v236, %v238
    %v240 = vadd.f32 %v236, %v239
    %vm241 = vweird.f32 %v160
    %vm242 = vweird.f32 %v236
    %vm243 = vmor %vm241, %vm242
    %v244 = vsel %vm243, %v236, %v240
    %v245 = vand.u32 2147483647, %v160
    %vm246 = vcmp.eq.f32.partialorder %v245, 8.507059e+37
    %v247 = vand.u32 %v160, 2147483648
    %v248 = vor.u32 1.1754944e-38, %v247
    %v249 = vsel %vm246, %v248, %v244
    %v250 = vmul.f32 1.0, %v249
    %v251 = vld [vmem:[%s3] sm:$0xff]
    %v252 = vld [vmem:[%s3 + $0x8] sm:$0xff]
    %v253 = vld [vmem:[%s3 + $0x10] sm:$0xff]
    %v254 = vld [vmem:[%s3 + $0x18] sm:$0xff]
    %v255 = vld [vmem:[%s3 + $0x20] sm:$0xff]
    %v256 = vld [vmem:[%s3 + $0x28] sm:$0x3]
    %v257 = vadd.s32 %v251, 2147483648
    %vm259 = vcmp.ge.s32.totalorder %v257, 3435973836
    %v260 = vadd.s32 %v252, 2147483648
    %vm262 = vcmp.ge.s32.totalorder %v260, 3435973836
    %v263 = vadd.s32 %v253, 2147483648
    %vm265 = vcmp.ge.s32.totalorder %v263, 3435973836
    %v266 = vadd.s32 %v254, 2147483648
    %vm268 = vcmp.ge.s32.totalorder %v266, 3435973836
    %v269 = vadd.s32 %v255, 2147483648
    %vm271 = vcmp.ge.s32.totalorder %v269, 3435973836
    %v272 = vadd.s32 %v256, 2147483648
    %vm274 = vcmp.ge.s32.totalorder %v272, 3435973836
    %v275 = vmul.f32 %v126, %v175
    %v276 = vmul.f32 %v128, %v190
    %v277 = vmul.f32 %v130, %v205
    %v278 = vmul.f32 %v132, %v220
    %v279 = vmul.f32 %v134, %v235
    %v280 = vmul.f32 %v136, %v250
    %v281 = vsel %vm259, %v275, 0.0
    %v282 = vsel %vm262, %v276, 0.0
    %v283 = vsel %vm265, %v277, 0.0
    %v284 = vsel %vm268, %v278, 0.0
    %v285 = vsel %vm271, %v279, 0.0
    %v286 = vsel %vm274, %v280, 0.0
    %v287 = vld [vmem:[%s2] sm:$0xff]
    %v288 = vld [vmem:[%s2 + $0x8] sm:$0xff]
    %v289 = vld [vmem:[%s2 + $0x10] sm:$0x1]
    %v291 = vsel %vm99, %v281, 0
    %v294 = vsel %vm99, %v282, 0
    %v297 = vsel %vm99, %v283, 0
    %v300 = vsel %vm99, %v284, 0
    %v303 = vsel %vm99, %v285, 0
    %v306 = vsel %vm99, %v286, 0
    %vm308 = vcmask 1040384
    %v310 = vsel %vm308, %v289, 0
    %312 = vmatpush.msra.mxu0 0.0
    %313 = vmatpush.msra.mxu0 0.0
    %314 = vmatpush.msra.mxu0 0.0
    %315 = vmatpush.msra.mxu0 0.0
    %316 = vmatpush.msra.mxu0 0.0
    %317 = vmatpush.msra.mxu0 0.0
    %318 = vmatpush.msra.mxu0 0.0
    %319 = vmatpush.msra.mxu0 0.0
    %320 = vmatpush.msra.mxu0 0.0
    %321 = vmatpush.msra.mxu0 0.0
    %322 = vmatpush.msra.mxu0 0.0
    %323 = vmatpush.msra.mxu0 0.0
    %324 = vmatpush.msra.mxu0 0.0
    %325 = vmatpush.msra.mxu0 %v310
    %326 = vmatpush.msra.mxu0 %v288
    %327 = vmatpush.msra.mxu0 %v287
    %328 = vmatmul.f32.gmra.mxu0 %v291
    %v329 = vpop.f32.mrf.mxu0
    %v330 = vadd.f32 0.0, %v329
    %331 = vmatmul.f32.gmra.mxu0 %v294
    %v332 = vpop.f32.mrf.mxu0
    %v333 = vadd.f32 0.0, %v332
    %334 = vmatmul.f32.gmra.mxu0 %v297
    %v335 = vpop.f32.mrf.mxu0
    %v336 = vadd.f32 0.0, %v335
    %337 = vmatmul.f32.gmra.mxu0 %v300
    %v338 = vpop.f32.mrf.mxu0
    %v339 = vadd.f32 0.0, %v338
    %340 = vmatmul.f32.gmra.mxu0 %v303
    %v341 = vpop.f32.mrf.mxu0
    %v342 = vadd.f32 0.0, %v341
    %343 = vmatmul.f32.gmra.mxu0 %v306
    %v344 = vpop.f32.mrf.mxu0
    %v345 = vadd.f32 0.0, %v344
    %346 = vdwg.mxu0
    %vm347 = vcmask 343040
    %348 = vst.msk [vmem:[#allocation2] sm:$0xff] %vm347, %v330
    %349 = vst.msk [vmem:[#allocation2 + $0x8] sm:$0xff] %vm347, %v333
    %350 = vst.msk [vmem:[#allocation2 + $0x10] sm:$0xff] %vm347, %v336
    %351 = vst.msk [vmem:[#allocation2 + $0x18] sm:$0xff] %vm347, %v339
    %352 = vst.msk [vmem:[#allocation2 + $0x20] sm:$0xff] %vm347, %v342
    %vm353 = vcmask 336896
    %354 = vst.msk [vmem:[#allocation2 + $0x28] sm:$0x3] %vm353, %v345
    // Predicated region
    $region18: #{model_forward.1} parent=1 // pred_check
      _
    $region19: #{model_forward.1} parent=1 // pred_check_branch
      %356 = sbr.rel (0) target = $region21
    $region20: #{model_forward.1} parent=1 // pred_region
      %358 = vsyncadd [#allocation3], 0
      %s359 = sshll.u32 [#allocation2], 4
      %s360 = int_to_ptr.vmem [resolvable:$true] %s359
      %s361 = sshll.u32 %s4, 4
      %s362 = int_to_ptr.hbm [resolvable:$true] %s361
      %367 = dma.vmem_to_hbm [thread:$0]  %s360, 768, %s362, [#allocation3], 128, 128, 8
    $region21: #{model_forward.1} parent=1 // pred_fallthru
      _
    // Predicated region
    $region22: #{model_forward.1} parent=1 // pred_check
      _
    $region23: #{model_forward.1} parent=1 // pred_check_branch
      %369 = sbr.rel (0) target = $region25
    $region24: #{model_forward.1} parent=1 // pred_region
      %371 = dma.done [#allocation3], 768
    $region25: #{model_forward.1} parent=1 // pred_fallthru
      _
    %372 = vsyncpa [#allocation3], 1

</llo_original>
